<compile_context>
chip_gen: v6e
topology: v6e:2x2x1
jax: 0.10.0
libtpu: 0.0.40
codegen_flags: <defaults>
</compile_context>

<pallas_src>
import jax
import jax.numpy as jnp
from jax.experimental import pallas as pl
from jax.experimental.pallas import tpu as pltpu

D_PAD = 128               # padded lane width for every layer output
SLAB_ROWS = 3 * D_PAD     # three packed 128x128 weight blocks (biases folded in)


def _round_up(x, m):
    return ((x + m - 1) // m) * m


def _qnet_kernel(s_ref, p_ref, q_ref):
    """One batch tile: three MXU matmuls with ReLU between layers.

    s_ref: (bb, K_in)  batch-padded states; column `state_dim` holds 1.0
                       (the constant-1 lane that carries the biases).
    p_ref: (384, 128)  packed parameter slab:
                       rows [  0,128) -> W0 block (b0 in row state_dim, 1.0 at [state_dim,127])
                       rows [128,256) -> W1 block (b1 in row 127,       1.0 at [127,127])
                       rows [256,384) -> W2 block (b2 in row 127)
    q_ref: (bb, 128)   padded Q-values (only lanes [0, action_dim) meaningful).
    """
    x = s_ref[...]                      # (bb, K_in)
    k_in = x.shape[1]                   # static at trace time

    w0 = p_ref[0:k_in, :]               # (K_in, 128)
    w1 = p_ref[D_PAD:2 * D_PAD, :]      # (128, 128)
    w2 = p_ref[2 * D_PAD:3 * D_PAD, :]  # (128, 128)

    h0 = jnp.maximum(jnp.dot(x, w0, preferred_element_type=jnp.float32), 0.0)
    h1 = jnp.maximum(jnp.dot(h0, w1, preferred_element_type=jnp.float32), 0.0)
    q = jnp.dot(h1, w2, preferred_element_type=jnp.float32)
    q_ref[...] = q.astype(q_ref.dtype)


def pack_qnet_params(params, state_dim, hid_shape, action_dim):
    """Pack (W, b) pairs into one zero-padded (384, 128) slab with biases folded
    into a constant-1 lane.  Do this ONCE, outside the hot loop.

    Layout (all unused entries zero):
      W0 block rows [0, 128):
        [0:state_dim, 0:h0]  = W0
        [state_dim,   0:h0]  = b0          (picked up by the constant-1 input lane)
        [state_dim,   127 ]  = 1.0         (propagates the constant into h0 lane 127)
      W1 block rows [128, 256):
        [128:128+h0, 0:h1]   = W1
        [255,        0:h1]   = b1
        [255,        127 ]   = 1.0         (propagates the constant into h1 lane 127)
      W2 block rows [256, 384):
        [256:256+h1, 0:action_dim] = W2
        [383,        0:action_dim] = b2
    """
    (w0, b0), (w1, b1), (w2, b2) = params
    h0, h1 = hid_shape
    # Lane 127 is reserved for the constant-1 channel.
    assert max(h0, h1, action_dim) <= D_PAD - 1, "layer width must be <= 127"
    assert state_dim + 1 <= D_PAD, "state_dim must be <= 127"

    slab = jnp.zeros((SLAB_ROWS, D_PAD), jnp.float32)
    # layer 0
    slab = slab.at[0:state_dim, 0:h0].set(w0)
    slab = slab.at[state_dim, 0:h0].set(b0.reshape(-1))
    slab = slab.at[state_dim, D_PAD - 1].set(1.0)
    # layer 1
    slab = slab.at[D_PAD:D_PAD + h0, 0:h1].set(w1)
    slab = slab.at[2 * D_PAD - 1, 0:h1].set(b1.reshape(-1))
    slab = slab.at[2 * D_PAD - 1, D_PAD - 1].set(1.0)
    # layer 2
    slab = slab.at[2 * D_PAD:2 * D_PAD + h1, 0:action_dim].set(w2)
    slab = slab.at[3 * D_PAD - 1, 0:action_dim].set(b2.reshape(-1))
    return slab


def q_net_forward(s, param_slab, state_dim, action_dim, *, block_b=None):
    """Q_Net forward for a whole batch of states in one pallas_call.

    s:          (B, state_dim) float32
    param_slab: (384, 128) float32 from pack_qnet_params
    block_b:    batch tile.  Default (None) = one tile covering the whole batch,
                which is optimal on single-TensorCore v5e/v6e.  On v7x pass
                block_b ≈ round_up(ceil(B/2), 8) so each of the two TensorCores
                gets exactly one tile of the "parallel" batch axis.
    returns:    (B, action_dim) float32
    """
    B, sd = s.shape
    assert sd == state_dim

    if block_b is None:
        bb = _round_up(B, 8)                         # single grid step
    else:
        bb = _round_up(min(block_b, _round_up(B, 8)), 8)
    B_pad = _round_up(B, bb)

    # Batch-padded states with a constant-1 column (no lane padding to 128).
    K_in = _round_up(state_dim + 1, 8)
    s_in = jnp.zeros((B_pad, K_in), jnp.float32)
    s_in = s_in.at[:B, :state_dim].set(s)
    s_in = s_in.at[:, state_dim].set(1.0)            # constant-1 lane carries the biases

    grid = (B_pad // bb,)
    out = pl.pallas_call(
        _qnet_kernel,
        out_shape=jax.ShapeDtypeStruct((B_pad, D_PAD), jnp.float32),
        grid=grid,
        in_specs=[
            # states: tiled over batch; last dim equals the full array dim (legal, lane-sparse on purpose)
            pl.BlockSpec((bb, K_in), lambda i: (i, 0)),
            # params: single resident block, one DMA
            pl.BlockSpec((SLAB_ROWS, D_PAD), lambda i: (0, 0)),
        ],
        # lane-dense output tile -> unmasked vst stores
        out_specs=pl.BlockSpec((bb, D_PAD), lambda i: (i, 0)),
        compiler_params=pltpu.CompilerParams(
            dimension_semantics=("parallel",),       # shard batch tiles across TCs on v7x
        ),
    )(s_in, param_slab)

    return out[:B, :action_dim]


def init_qnet_params(key, state_dim, hid_shape, action_dim):
    """Same layer shapes as the PyTorch module; W stored (in, out), b stored (out,)."""
    layer_shape = [state_dim] + list(hid_shape) + [action_dim]
    params = []
    for j in range(len(layer_shape) - 1):
        fan_in, fan_out = layer_shape[j], layer_shape[j + 1]
        key, wk, bk = jax.random.split(key, 3)
        bound = 1.0 / jnp.sqrt(fan_in)               # matches nn.Linear default init
        w = jax.random.uniform(wk, (fan_in, fan_out), jnp.float32, -bound, bound)
        b = jax.random.uniform(bk, (fan_out,), jnp.float32, -bound, bound)
        params.append((w, b))
    return params


def q_net_reference(s, params):
    """Pure-JAX reference for correctness checking."""
    x = s
    n = len(params)
    for j, (w, b) in enumerate(params):
        x = x @ w + b
        if j < n - 1:
            x = jnp.maximum(x, 0.0)
    return x


if __name__ == "__main__":
    key = jax.random.PRNGKey(0)

    # D3QN-style replay batch: batch the whole replay minibatch per launch so the
    # fixed pallas_call / DMA overhead is amortized.
    batch = 256
    state_dim = 16
    hid_shape = (32, 32)
    action_dim = 4

    key, skey = jax.random.split(key)
    s = jax.random.normal(skey, (batch, state_dim), jnp.float32)

    params = init_qnet_params(key, state_dim, hid_shape, action_dim)
    param_slab = pack_qnet_params(params, state_dim, hid_shape, action_dim)

    # Default: single tile (best on v5e/v6e).  On v7x: block_b=_round_up(batch // 2, 8).
    q = q_net_forward(s, param_slab, state_dim, action_dim)
    q = jax.block_until_ready(q)

    q_ref = q_net_reference(s, params)
    assert q.shape == (batch, action_dim)
    assert jnp.allclose(q, q_ref, atol=1e-5, rtol=1e-5)

    print("KERNEL_OK")
</pallas_src>

<mosaic_0001>
module attributes {stable_mosaic.version = 11 : i64} {
  func.func @_qnet_kernel(%arg0: i32, %arg1: memref<256x24xf32, #tpu.memory_space<vmem>>, %arg2: memref<384x128xf32, #tpu.memory_space<vmem>>, %arg3: memref<256x128xf32, #tpu.memory_space<vmem>>) attributes {dimension_semantics = [#tpu.dimension_semantics<parallel>], iteration_bounds = array<i64: 1>, scalar_prefetch = 0 : i64, scratch_operands = 0 : i64, tpu.core_type = #tpu.core_type<tc>, window_params = [{transform_indices = @transform_0, window_bounds = array<i64: 256, 24>}, {pipeline_mode = #tpu.pipeline_mode<synchronous>, transform_indices = @transform_1, window_bounds = array<i64: 384, 128>}, {transform_indices = @transform_2, window_bounds = array<i64: 256, 128>}]} {
    %c0 = arith.constant 0 : index
    %c0_0 = arith.constant 0 : index
    %0 = vector.load %arg1[%c0, %c0_0] : memref<256x24xf32, #tpu.memory_space<vmem>>, vector<256x24xf32>
    %c0_1 = arith.constant 0 : index
    %c0_2 = arith.constant 0 : index
    %1 = vector.load %arg2[%c0_1, %c0_2] : memref<384x128xf32, #tpu.memory_space<vmem>>, vector<24x128xf32>
    %c128 = arith.constant 128 : index
    %c0_3 = arith.constant 0 : index
    %2 = vector.load %arg2[%c128, %c0_3] : memref<384x128xf32, #tpu.memory_space<vmem>>, vector<128x128xf32>
    %c256 = arith.constant 256 : index
    %c0_4 = arith.constant 0 : index
    %3 = vector.load %arg2[%c256, %c0_4] : memref<384x128xf32, #tpu.memory_space<vmem>>, vector<128x128xf32>
    %cst = arith.constant dense<0.000000e+00> : vector<256x128xf32>
    %4 = tpu.matmul %0, %1, %cst {dimension_numbers = #tpu.dot_dimension_numbers<[1], [0], [0], [1], [0, 0, 1, 1], [], []>} : vector<256x24xf32>, vector<24x128xf32>, vector<256x128xf32> -> vector<256x128xf32>
    %cst_5 = arith.constant 0.000000e+00 : f32
    %5 = vector.broadcast %cst_5 : f32 to vector<256x128xf32>
    %6 = arith.maximumf %4, %5 : vector<256x128xf32>
    %cst_6 = arith.constant dense<0.000000e+00> : vector<256x128xf32>
    %7 = tpu.matmul %6, %2, %cst_6 {dimension_numbers = #tpu.dot_dimension_numbers<[1], [0], [0], [1], [0, 0, 1, 1], [], []>} : vector<256x128xf32>, vector<128x128xf32>, vector<256x128xf32> -> vector<256x128xf32>
    %cst_7 = arith.constant 0.000000e+00 : f32
    %8 = vector.broadcast %cst_7 : f32 to vector<256x128xf32>
    %9 = arith.maximumf %7, %8 : vector<256x128xf32>
    %cst_8 = arith.constant dense<0.000000e+00> : vector<256x128xf32>
    %10 = tpu.matmul %9, %3, %cst_8 {dimension_numbers = #tpu.dot_dimension_numbers<[1], [0], [0], [1], [0, 0, 1, 1], [], []>} : vector<256x128xf32>, vector<128x128xf32>, vector<256x128xf32> -> vector<256x128xf32>
    %c0_9 = arith.constant 0 : index
    %c0_10 = arith.constant 0 : index
    %11 = vector.load %arg3[%c0_9, %c0_10] : memref<256x128xf32, #tpu.memory_space<vmem>>, vector<256x128xf32>
    tpu.vector_store %arg3[%c0_9, %c0_10], %10 {strides = array<i32>} : memref<256x128xf32, #tpu.memory_space<vmem>>, vector<256x128xf32>,
    return
  }
  func.func @transform_0(%arg0: i32) -> (i32, i32) {
    %c0_i32 = arith.constant 0 : i32
    %c0_i32_0 = arith.constant 0 : i32
    return %arg0, %c0_i32 : i32, i32
  }
  func.func @transform_1(%arg0: i32) -> (i32, i32) {
    %c0_i32 = arith.constant 0 : i32
    %c0_i32_0 = arith.constant 0 : i32
    %c0_i32_1 = arith.constant 0 : i32
    return %c0_i32, %c0_i32_0 : i32, i32
  }
  func.func @transform_2(%arg0: i32) -> (i32, i32) {
    %c0_i32 = arith.constant 0 : i32
    %c0_i32_0 = arith.constant 0 : i32
    return %arg0, %c0_i32 : i32, i32
  }
}

</mosaic_0001>

<llo_original>
// kernel: tpu_custom_call.1
$region0: #{tpu_custom_call.1}
  #allocation0 [shape = 'u32[]', space=smem, size = 0x4, offset = 0x4, fixed_abs, tag = 'smem constant byte address 0x4 - core index']
  #allocation1 [shape = 'u32[144,128]{1,0:T(1,128)}', space=vmem, size = 0x12000, scoped, tag = 'internal scratch']
  %s0 = inlined_call_operand.vmem [shape: f32[256,24], index: 0, kind: input, shape index: {}]
  %s1 = inlined_call_operand.hbm [shape: f32[384,128], index: 1, kind: input, shape index: {}]
  %s2 = inlined_call_operand.hbm [shape: f32[256,128], index: 2, kind: output, shape index: {}]
  %s3 = sld [smem:[#allocation0]]
  $region22: #{tpu_custom_call.1} parent=0
    _
  %s5 = ssub.s32 1, %s3
  %s6 = scalar_select 0, %s5, %s3
  $region1: #{tpu_custom_call.1} parent=0
    #allocation2 [shape = 'u8[196608]{0}', space=vmem, size = 0x30000, scoped, tag = 'input window, operand 1, single buffered']
    #allocation3 [shape = 's32[1]{0}', space=sflag, size = 0x4, scoped, tag = 'scoped memory for tpu_custom_call.1']
    #allocation4 [shape = 's32[1]{0}', space=sflag, size = 0x4, scoped, tag = 'scoped memory for tpu_custom_call.1']
    #allocation5 [shape = 'u8[131072]{0}', space=vmem, size = 0x20000, scoped, tag = 'output window, operand 0, single buffered']
    %7 = vsyncpa [#allocation3], 0
    %8 = vsyncpa [#allocation4], 0
    // Predicated region
    $region2: #{tpu_custom_call.1} parent=1 // pred_check
      _
    $region3: #{tpu_custom_call.1} parent=1 // pred_check_branch
      %10 = sbr.rel (0) target = $region5
    $region4: #{tpu_custom_call.1} parent=1 // pred_region
      _
    $region5: #{tpu_custom_call.1} parent=1 // pred_fallthru
      _
    // Predicated region
    $region6: #{tpu_custom_call.1} parent=1 // pred_check
      _
    $region7: #{tpu_custom_call.1} parent=1 // pred_check_branch
      %12 = sbr.rel (0) target = $region9
    $region8: #{tpu_custom_call.1} parent=1 // pred_region
      %s14 = ssub.s32 6144, 6144
      %15 = vsyncadd [#allocation3], %s14
      %s16 = sshll.u32 [#allocation2], 4
      %s17 = int_to_ptr.vmem [resolvable:$true] %s16
      %22 = dma.hbm_to_vmem [thread:$0]  %s1, 6144, %s17, [#allocation3], 128, 128, 8
    $region9: #{tpu_custom_call.1} parent=1 // pred_fallthru
      _
    // Predicated region
    $region10: #{tpu_custom_call.1} parent=1 // pred_check
      _
    $region11: #{tpu_custom_call.1} parent=1 // pred_check_branch
      %24 = sbr.rel (0) target = $region13
    $region12: #{tpu_custom_call.1} parent=1 // pred_region
      %25 = dma.done [#allocation3], 6144
    $region13: #{tpu_custom_call.1} parent=1 // pred_fallthru
      _
    %v26 = vld [vmem:[%s0] sm:$0xff]
    %v27 = vld [vmem:[%s0 + $0x8] sm:$0xff]
    %v28 = vld [vmem:[%s0 + $0x10] sm:$0xff]
    %v29 = vld [vmem:[%s0 + $0x18] sm:$0xff]
    %v30 = vld [vmem:[%s0 + $0x20] sm:$0xff]
    %v31 = vld [vmem:[%s0 + $0x28] sm:$0xff]
    %v32 = vld [vmem:[%s0 + $0x30] sm:$0xff]
    %v33 = vld [vmem:[%s0 + $0x38] sm:$0xff]
    %v34 = vld [vmem:[%s0 + $0x40] sm:$0xff]
    %v35 = vld [vmem:[%s0 + $0x48] sm:$0xff]
    %v36 = vld [vmem:[%s0 + $0x50] sm:$0xff]
    %v37 = vld [vmem:[%s0 + $0x58] sm:$0xff]
    %v38 = vld [vmem:[%s0 + $0x60] sm:$0xff]
    %v39 = vld [vmem:[%s0 + $0x68] sm:$0xff]
    %v40 = vld [vmem:[%s0 + $0x70] sm:$0xff]
    %v41 = vld [vmem:[%s0 + $0x78] sm:$0xff]
    %v42 = vld [vmem:[%s0 + $0x80] sm:$0xff]
    %v43 = vld [vmem:[%s0 + $0x88] sm:$0xff]
    %v44 = vld [vmem:[%s0 + $0x90] sm:$0xff]
    %v45 = vld [vmem:[%s0 + $0x98] sm:$0xff]
    %v46 = vld [vmem:[%s0 + $0xa0] sm:$0xff]
    %v47 = vld [vmem:[%s0 + $0xa8] sm:$0xff]
    %v48 = vld [vmem:[%s0 + $0xb0] sm:$0xff]
    %v49 = vld [vmem:[%s0 + $0xb8] sm:$0xff]
    %v50 = vld [vmem:[%s0 + $0xc0] sm:$0xff]
    %v51 = vld [vmem:[%s0 + $0xc8] sm:$0xff]
    %v52 = vld [vmem:[%s0 + $0xd0] sm:$0xff]
    %v53 = vld [vmem:[%s0 + $0xd8] sm:$0xff]
    %v54 = vld [vmem:[%s0 + $0xe0] sm:$0xff]
    %v55 = vld [vmem:[%s0 + $0xe8] sm:$0xff]
    %v56 = vld [vmem:[%s0 + $0xf0] sm:$0xff]
    %v57 = vld [vmem:[%s0 + $0xf8] sm:$0xff]
    %v58 = vld [vmem:[#allocation2] sm:$0xff]
    %v59 = vld [vmem:[#allocation2 + $0x8] sm:$0xff]
    %v60 = vld [vmem:[#allocation2 + $0x10] sm:$0xff]
    %v61 = vld [vmem:[#allocation2 + $0x80] sm:$0xff]
    %v62 = vld [vmem:[#allocation2 + $0x88] sm:$0xff]
    %v63 = vld [vmem:[#allocation2 + $0x90] sm:$0xff]
    %v64 = vld [vmem:[#allocation2 + $0x98] sm:$0xff]
    %v65 = vld [vmem:[#allocation2 + $0xa0] sm:$0xff]
    %v66 = vld [vmem:[#allocation2 + $0xa8] sm:$0xff]
    %v67 = vld [vmem:[#allocation2 + $0xb0] sm:$0xff]
    %v68 = vld [vmem:[#allocation2 + $0xb8] sm:$0xff]
    %v69 = vld [vmem:[#allocation2 + $0xc0] sm:$0xff]
    %v70 = vld [vmem:[#allocation2 + $0xc8] sm:$0xff]
    %v71 = vld [vmem:[#allocation2 + $0xd0] sm:$0xff]
    %v72 = vld [vmem:[#allocation2 + $0xd8] sm:$0xff]
    %v73 = vld [vmem:[#allocation2 + $0xe0] sm:$0xff]
    %v74 = vld [vmem:[#allocation2 + $0xe8] sm:$0xff]
    %v75 = vld [vmem:[#allocation2 + $0xf0] sm:$0xff]
    %v76 = vld [vmem:[#allocation2 + $0xf8] sm:$0xff]
    %v77 = vld [vmem:[#allocation2 + $0x100] sm:$0xff]
    %v78 = vld [vmem:[#allocation2 + $0x108] sm:$0xff]
    %v79 = vld [vmem:[#allocation2 + $0x110] sm:$0xff]
    %v80 = vld [vmem:[#allocation2 + $0x118] sm:$0xff]
    %v81 = vld [vmem:[#allocation2 + $0x120] sm:$0xff]
    %v82 = vld [vmem:[#allocation2 + $0x128] sm:$0xff]
    %v83 = vld [vmem:[#allocation2 + $0x130] sm:$0xff]
    %v84 = vld [vmem:[#allocation2 + $0x138] sm:$0xff]
    %v85 = vld [vmem:[#allocation2 + $0x140] sm:$0xff]
    %v86 = vld [vmem:[#allocation2 + $0x148] sm:$0xff]
    %v87 = vld [vmem:[#allocation2 + $0x150] sm:$0xff]
    %v88 = vld [vmem:[#allocation2 + $0x158] sm:$0xff]
    %v89 = vld [vmem:[#allocation2 + $0x160] sm:$0xff]
    %v90 = vld [vmem:[#allocation2 + $0x168] sm:$0xff]
    %v91 = vld [vmem:[#allocation2 + $0x170] sm:$0xff]
    %v92 = vld [vmem:[#allocation2 + $0x178] sm:$0xff]
    %vm93 = vcmask 195584
    %v95 = vsel %vm93, %v26, 0
    %v98 = vsel %vm93, %v27, 0
    %v101 = vsel %vm93, %v28, 0
    %v104 = vsel %vm93, %v29, 0
    %v107 = vsel %vm93, %v30, 0
    %v110 = vsel %vm93, %v31, 0
    %v113 = vsel %vm93, %v32, 0
    %v116 = vsel %vm93, %v33, 0
    %v119 = vsel %vm93, %v34, 0
    %v122 = vsel %vm93, %v35, 0
    %v125 = vsel %vm93, %v36, 0
    %v128 = vsel %vm93, %v37, 0
    %v131 = vsel %vm93, %v38, 0
    %v134 = vsel %vm93, %v39, 0
    %v137 = vsel %vm93, %v40, 0
    %v140 = vsel %vm93, %v41, 0
    %v143 = vsel %vm93, %v42, 0
    %v146 = vsel %vm93, %v43, 0
    %v149 = vsel %vm93, %v44, 0
    %v152 = vsel %vm93, %v45, 0
    %v155 = vsel %vm93, %v46, 0
    %v158 = vsel %vm93, %v47, 0
    %v161 = vsel %vm93, %v48, 0
    %v164 = vsel %vm93, %v49, 0
    %v167 = vsel %vm93, %v50, 0
    %v170 = vsel %vm93, %v51, 0
    %v173 = vsel %vm93, %v52, 0
    %v176 = vsel %vm93, %v53, 0
    %v179 = vsel %vm93, %v54, 0
    %v182 = vsel %vm93, %v55, 0
    %v185 = vsel %vm93, %v56, 0
    %v188 = vsel %vm93, %v57, 0
    %190 = vmatprep.subr.mxu0 0.0
    %191 = vmatpush1.msra.mxu0 0.0
    %192 = vmatprep.subr.mxu0 0.0
    %193 = vmatpush1.msra.mxu0 0.0
    %194 = vmatprep.subr.mxu0 0.0
    %195 = vmatpush1.msra.mxu0 0.0
    %196 = vmatprep.subr.mxu0 0.0
    %197 = vmatpush1.msra.mxu0 0.0
    %198 = vmatprep.subr.mxu0 0.0
    %199 = vmatpush1.msra.mxu0 0.0
    %200 = vmatprep.subr.mxu0 0.0
    %201 = vmatpush1.msra.mxu0 0.0
    %202 = vmatprep.subr.mxu0 0.0
    %203 = vmatpush1.msra.mxu0 0.0
    %204 = vmatprep.subr.mxu0 0.0
    %205 = vmatpush1.msra.mxu0 0.0
    %206 = vmatprep.subr.mxu0 0.0
    %207 = vmatpush1.msra.mxu0 0.0
    %208 = vmatprep.subr.mxu0 0.0
    %209 = vmatpush1.msra.mxu0 0.0
    %210 = vmatprep.subr.mxu0 0.0
    %211 = vmatpush1.msra.mxu0 0.0
    %212 = vmatprep.subr.mxu0 0.0
    %213 = vmatpush1.msra.mxu0 0.0
    %214 = vmatprep.subr.mxu0 0.0
    %215 = vmatpush1.msra.mxu0 0.0
    %216 = vmatprep.subr.mxu0 0.0
    %217 = vmatpush1.msra.mxu0 %v60
    %218 = vmatprep.subr.mxu0 0.0
    %219 = vmatpush1.msra.mxu0 %v59
    %220 = vmatprep.subr.mxu0 0.0
    %221 = vmatpush1.msra.mxu0 %v58
    %222 = vmatprep.subr.mxu0 0.0
    %223 = vmatpush2.msra.mxu0 0.0
    %224 = vmatprep.subr.mxu0 0.0
    %225 = vmatpush2.msra.mxu0 0.0
    %226 = vmatprep.subr.mxu0 0.0
    %227 = vmatpush2.msra.mxu0 0.0
    %228 = vmatprep.subr.mxu0 0.0
    %229 = vmatpush2.msra.mxu0 0.0
    %230 = vmatprep.subr.mxu0 0.0
    %231 = vmatpush2.msra.mxu0 0.0
    %232 = vmatprep.subr.mxu0 0.0
    %233 = vmatpush2.msra.mxu0 0.0
    %234 = vmatprep.subr.mxu0 0.0
    %235 = vmatpush2.msra.mxu0 0.0
    %236 = vmatprep.subr.mxu0 0.0
    %237 = vmatpush2.msra.mxu0 0.0
    %238 = vmatprep.subr.mxu0 0.0
    %239 = vmatpush2.msra.mxu0 0.0
    %240 = vmatprep.subr.mxu0 0.0
    %241 = vmatpush2.msra.mxu0 0.0
    %242 = vmatprep.subr.mxu0 0.0
    %243 = vmatpush2.msra.mxu0 0.0
    %244 = vmatprep.subr.mxu0 0.0
    %245 = vmatpush2.msra.mxu0 0.0
    %246 = vmatprep.subr.mxu0 0.0
    %247 = vmatpush2.msra.mxu0 0.0
    %248 = vmatprep.subr.mxu0 0.0
    %249 = vmatpush2.msra.mxu0 0.0
    %250 = vmatprep.subr.mxu0 0.0
    %251 = vmatpush2.msra.mxu0 0.0
    %252 = vmatprep.subr.mxu0 0.0
    %253 = vmatpush2.msra.mxu0 0.0
    %254 = vmatprep.mubr.f32.mxu0 0.0
    %255 = vmatmul.mubr.f32.gmra.mxu0 %v95
    %v256 = vpop.f32.mrf.mxu0
    %v257 = vadd.f32 0.0, %v256
    %v258 = vpop.f32.mrf.mxu0
    %259 = vmatprep.mubr.f32.mxu0 0.0
    %260 = vmatmul.mubr.f32.gmra.mxu0 %v98
    %v261 = vpop.f32.mrf.mxu0
    %v262 = vadd.f32 0.0, %v261
    %v263 = vpop.f32.mrf.mxu0
    %264 = vmatprep.mubr.f32.mxu0 0.0
    %265 = vmatmul.mubr.f32.gmra.mxu0 %v101
    %v266 = vpop.f32.mrf.mxu0
    %v267 = vadd.f32 0.0, %v266
    %v268 = vpop.f32.mrf.mxu0
    %269 = vmatprep.mubr.f32.mxu0 0.0
    %270 = vmatmul.mubr.f32.gmra.mxu0 %v104
    %v271 = vpop.f32.mrf.mxu0
    %v272 = vadd.f32 0.0, %v271
    %v273 = vpop.f32.mrf.mxu0
    %274 = vmatprep.mubr.f32.mxu0 0.0
    %275 = vmatmul.mubr.f32.gmra.mxu0 %v107
    %v276 = vpop.f32.mrf.mxu0
    %v277 = vadd.f32 0.0, %v276
    %v278 = vpop.f32.mrf.mxu0
    %279 = vmatprep.mubr.f32.mxu0 0.0
    %280 = vmatmul.mubr.f32.gmra.mxu0 %v110
    %v281 = vpop.f32.mrf.mxu0
    %v282 = vadd.f32 0.0, %v281
    %v283 = vpop.f32.mrf.mxu0
    %284 = vmatprep.mubr.f32.mxu0 0.0
    %285 = vmatmul.mubr.f32.gmra.mxu0 %v113
    %v286 = vpop.f32.mrf.mxu0
    %v287 = vadd.f32 0.0, %v286
    %v288 = vpop.f32.mrf.mxu0
    %289 = vmatprep.mubr.f32.mxu0 0.0
    %290 = vmatmul.mubr.f32.gmra.mxu0 %v116
    %v291 = vpop.f32.mrf.mxu0
    %v292 = vadd.f32 0.0, %v291
    %v293 = vpop.f32.mrf.mxu0
    %294 = vmatprep.mubr.f32.mxu0 0.0
    %295 = vmatmul.mubr.f32.gmra.mxu0 %v119
    %v296 = vpop.f32.mrf.mxu0
    %v297 = vadd.f32 0.0, %v296
    %v298 = vpop.f32.mrf.mxu0
    %299 = vmatprep.mubr.f32.mxu0 0.0
    %300 = vmatmul.mubr.f32.gmra.mxu0 %v122
    %v301 = vpop.f32.mrf.mxu0
    %v302 = vadd.f32 0.0, %v301
    %v303 = vpop.f32.mrf.mxu0
    %304 = vmatprep.mubr.f32.mxu0 0.0
    %305 = vmatmul.mubr.f32.gmra.mxu0 %v125
    %v306 = vpop.f32.mrf.mxu0
    %v307 = vadd.f32 0.0, %v306
    %v308 = vpop.f32.mrf.mxu0
    %309 = vmatprep.mubr.f32.mxu0 0.0
    %310 = vmatmul.mubr.f32.gmra.mxu0 %v128
    %v311 = vpop.f32.mrf.mxu0
    %v312 = vadd.f32 0.0, %v311
    %v313 = vpop.f32.mrf.mxu0
    %314 = vmatprep.mubr.f32.mxu0 0.0
    %315 = vmatmul.mubr.f32.gmra.mxu0 %v131
    %v316 = vpop.f32.mrf.mxu0
    %v317 = vadd.f32 0.0, %v316
    %v318 = vpop.f32.mrf.mxu0
    %319 = vmatprep.mubr.f32.mxu0 0.0
    %320 = vmatmul.mubr.f32.gmra.mxu0 %v134
    %v321 = vpop.f32.mrf.mxu0
    %v322 = vadd.f32 0.0, %v321
    %v323 = vpop.f32.mrf.mxu0
    %324 = vmatprep.mubr.f32.mxu0 0.0
    %325 = vmatmul.mubr.f32.gmra.mxu0 %v137
    %v326 = vpop.f32.mrf.mxu0
    %v327 = vadd.f32 0.0, %v326
    %v328 = vpop.f32.mrf.mxu0
    %329 = vmatprep.mubr.f32.mxu0 0.0
    %330 = vmatmul.mubr.f32.gmra.mxu0 %v140
    %v331 = vpop.f32.mrf.mxu0
    %v332 = vadd.f32 0.0, %v331
    %v333 = vpop.f32.mrf.mxu0
    %334 = vmatprep.mubr.f32.mxu0 0.0
    %335 = vmatmul.mubr.f32.gmra.mxu0 %v143
    %v336 = vpop.f32.mrf.mxu0
    %v337 = vadd.f32 0.0, %v336
    %v338 = vpop.f32.mrf.mxu0
    %339 = vmatprep.mubr.f32.mxu0 0.0
    %340 = vmatmul.mubr.f32.gmra.mxu0 %v146
    %v341 = vpop.f32.mrf.mxu0
    %v342 = vadd.f32 0.0, %v341
    %v343 = vpop.f32.mrf.mxu0
    %344 = vmatprep.mubr.f32.mxu0 0.0
    %345 = vmatmul.mubr.f32.gmra.mxu0 %v149
    %v346 = vpop.f32.mrf.mxu0
    %v347 = vadd.f32 0.0, %v346
    %v348 = vpop.f32.mrf.mxu0
    %349 = vmatprep.mubr.f32.mxu0 0.0
    %350 = vmatmul.mubr.f32.gmra.mxu0 %v152
    %v351 = vpop.f32.mrf.mxu0
    %v352 = vadd.f32 0.0, %v351
    %v353 = vpop.f32.mrf.mxu0
    %354 = vmatprep.mubr.f32.mxu0 0.0
    %355 = vmatmul.mubr.f32.gmra.mxu0 %v155
    %v356 = vpop.f32.mrf.mxu0
    %v357 = vadd.f32 0.0, %v356
    %v358 = vpop.f32.mrf.mxu0
    %359 = vmatprep.mubr.f32.mxu0 0.0
    %360 = vmatmul.mubr.f32.gmra.mxu0 %v158
    %v361 = vpop.f32.mrf.mxu0
    %v362 = vadd.f32 0.0, %v361
    %v363 = vpop.f32.mrf.mxu0
    %364 = vmatprep.mubr.f32.mxu0 0.0
    %365 = vmatmul.mubr.f32.gmra.mxu0 %v161
    %v366 = vpop.f32.mrf.mxu0
    %v367 = vadd.f32 0.0, %v366
    %v368 = vpop.f32.mrf.mxu0
    %369 = vmatprep.mubr.f32.mxu0 0.0
    %370 = vmatmul.mubr.f32.gmra.mxu0 %v164
    %v371 = vpop.f32.mrf.mxu0
    %v372 = vadd.f32 0.0, %v371
    %v373 = vpop.f32.mrf.mxu0
    %374 = vmatprep.mubr.f32.mxu0 0.0
    %375 = vmatmul.mubr.f32.gmra.mxu0 %v167
    %v376 = vpop.f32.mrf.mxu0
    %v377 = vadd.f32 0.0, %v376
    %v378 = vpop.f32.mrf.mxu0
    %379 = vmatprep.mubr.f32.mxu0 0.0
    %380 = vmatmul.mubr.f32.gmra.mxu0 %v170
    %v381 = vpop.f32.mrf.mxu0
    %v382 = vadd.f32 0.0, %v381
    %v383 = vpop.f32.mrf.mxu0
    %384 = vmatprep.mubr.f32.mxu0 0.0
    %385 = vmatmul.mubr.f32.gmra.mxu0 %v173
    %v386 = vpop.f32.mrf.mxu0
    %v387 = vadd.f32 0.0, %v386
    %v388 = vpop.f32.mrf.mxu0
    %389 = vmatprep.mubr.f32.mxu0 0.0
    %390 = vmatmul.mubr.f32.gmra.mxu0 %v176
    %v391 = vpop.f32.mrf.mxu0
    %v392 = vadd.f32 0.0, %v391
    %v393 = vpop.f32.mrf.mxu0
    %394 = vmatprep.mubr.f32.mxu0 0.0
    %395 = vmatmul.mubr.f32.gmra.mxu0 %v179
    %v396 = vpop.f32.mrf.mxu0
    %v397 = vadd.f32 0.0, %v396
    %v398 = vpop.f32.mrf.mxu0
    %399 = vmatprep.mubr.f32.mxu0 0.0
    %400 = vmatmul.mubr.f32.gmra.mxu0 %v182
    %v401 = vpop.f32.mrf.mxu0
    %v402 = vadd.f32 0.0, %v401
    %v403 = vpop.f32.mrf.mxu0
    %404 = vmatprep.mubr.f32.mxu0 0.0
    %405 = vmatmul.mubr.f32.gmra.mxu0 %v185
    %v406 = vpop.f32.mrf.mxu0
    %v407 = vadd.f32 0.0, %v406
    %v408 = vpop.f32.mrf.mxu0
    %409 = vmatprep.mubr.f32.mxu0 0.0
    %410 = vmatmul.mubr.f32.gmra.mxu0 %v188
    %v411 = vpop.f32.mrf.mxu0
    %v412 = vadd.f32 0.0, %v411
    %v413 = vpop.f32.mrf.mxu0
    %414 = vdwg.mxu0
    %v415 = vmax.f32 %v257, 0.0
    %v416 = vmax.f32 %v262, 0.0
    %v417 = vmax.f32 %v267, 0.0
    %v418 = vmax.f32 %v272, 0.0
    %v419 = vmax.f32 %v277, 0.0
    %v420 = vmax.f32 %v282, 0.0
    %v421 = vmax.f32 %v287, 0.0
    %v422 = vmax.f32 %v292, 0.0
    %v423 = vmax.f32 %v297, 0.0
    %v424 = vmax.f32 %v302, 0.0
    %v425 = vmax.f32 %v307, 0.0
    %v426 = vmax.f32 %v312, 0.0
    %v427 = vmax.f32 %v317, 0.0
    %v428 = vmax.f32 %v322, 0.0
    %v429 = vmax.f32 %v327, 0.0
    %v430 = vmax.f32 %v332, 0.0
    %v431 = vmax.f32 %v337, 0.0
    %v432 = vmax.f32 %v342, 0.0
    %v433 = vmax.f32 %v347, 0.0
    %v434 = vmax.f32 %v352, 0.0
    %v435 = vmax.f32 %v357, 0.0
    %v436 = vmax.f32 %v362, 0.0
    %v437 = vmax.f32 %v367, 0.0
    %v438 = vmax.f32 %v372, 0.0
    %v439 = vmax.f32 %v377, 0.0
    %v440 = vmax.f32 %v382, 0.0
    %v441 = vmax.f32 %v387, 0.0
    %v442 = vmax.f32 %v392, 0.0
    %v443 = vmax.f32 %v397, 0.0
    %v444 = vmax.f32 %v402, 0.0
    %v445 = vmax.f32 %v407, 0.0
    %v446 = vmax.f32 %v412, 0.0
    %447 = vmatprep.subr.mxu0 0.0
    %448 = vmatpush1.msra.mxu0 %v76
    %449 = vmatprep.subr.mxu0 0.0
    %450 = vmatpush1.msra.mxu0 %v75
    %451 = vmatprep.subr.mxu0 0.0
    %452 = vmatpush1.msra.mxu0 %v74
    %453 = vmatprep.subr.mxu0 0.0
    %454 = vmatpush1.msra.mxu0 %v73
    %455 = vmatprep.subr.mxu0 0.0
    %456 = vmatpush1.msra.mxu0 %v72
    %457 = vmatprep.subr.mxu0 0.0
    %458 = vmatpush1.msra.mxu0 %v71
    %459 = vmatprep.subr.mxu0 0.0
    %460 = vmatpush1.msra.mxu0 %v70
    %461 = vmatprep.subr.mxu0 0.0
    %462 = vmatpush1.msra.mxu0 %v69
    %463 = vmatprep.subr.mxu0 0.0
    %464 = vmatpush1.msra.mxu0 %v68
    %465 = vmatprep.subr.mxu0 0.0
    %466 = vmatpush1.msra.mxu0 %v67
    %467 = vmatprep.subr.mxu0 0.0
    %468 = vmatpush1.msra.mxu0 %v66
    %469 = vmatprep.subr.mxu0 0.0
    %470 = vmatpush1.msra.mxu0 %v65
    %471 = vmatprep.subr.mxu0 0.0
    %472 = vmatpush1.msra.mxu0 %v64
    %473 = vmatprep.subr.mxu0 0.0
    %474 = vmatpush1.msra.mxu0 %v63
    %475 = vmatprep.subr.mxu0 0.0
    %476 = vmatpush1.msra.mxu0 %v62
    %477 = vmatprep.subr.mxu0 0.0
    %478 = vmatpush1.msra.mxu0 %v61
    %479 = vmatprep.subr.mxu0 0.0
    %480 = vmatpush2.msra.mxu0 0.0
    %481 = vmatprep.subr.mxu0 0.0
    %482 = vmatpush2.msra.mxu0 0.0
    %483 = vmatprep.subr.mxu0 0.0
    %484 = vmatpush2.msra.mxu0 0.0
    %485 = vmatprep.subr.mxu0 0.0
    %486 = vmatpush2.msra.mxu0 0.0
    %487 = vmatprep.subr.mxu0 0.0
    %488 = vmatpush2.msra.mxu0 0.0
    %489 = vmatprep.subr.mxu0 0.0
    %490 = vmatpush2.msra.mxu0 0.0
    %491 = vmatprep.subr.mxu0 0.0
    %492 = vmatpush2.msra.mxu0 0.0
    %493 = vmatprep.subr.mxu0 0.0
    %494 = vmatpush2.msra.mxu0 0.0
    %495 = vmatprep.subr.mxu0 0.0
    %496 = vmatpush2.msra.mxu0 0.0
    %497 = vmatprep.subr.mxu0 0.0
    %498 = vmatpush2.msra.mxu0 0.0
    %499 = vmatprep.subr.mxu0 0.0
    %500 = vmatpush2.msra.mxu0 0.0
    %501 = vmatprep.subr.mxu0 0.0
    %502 = vmatpush2.msra.mxu0 0.0
    %503 = vmatprep.subr.mxu0 0.0
    %504 = vmatpush2.msra.mxu0 0.0
    %505 = vmatprep.subr.mxu0 0.0
    %506 = vmatpush2.msra.mxu0 0.0
    %507 = vmatprep.subr.mxu0 0.0
    %508 = vmatpush2.msra.mxu0 0.0
    %509 = vmatprep.subr.mxu0 0.0
    %510 = vmatpush2.msra.mxu0 0.0
    %511 = vmatprep.mubr.f32.mxu0 0.0
    %512 = vmatmul.mubr.f32.gmra.mxu0 %v415
    %v513 = vpop.f32.mrf.mxu0
    %v514 = vadd.f32 0.0, %v513
    %v515 = vpop.f32.mrf.mxu0
    %516 = vmatprep.mubr.f32.mxu0 0.0
    %517 = vmatmul.mubr.f32.gmra.mxu0 %v416
    %v518 = vpop.f32.mrf.mxu0
    %v519 = vadd.f32 0.0, %v518
    %v520 = vpop.f32.mrf.mxu0
    %521 = vmatprep.mubr.f32.mxu0 0.0
    %522 = vmatmul.mubr.f32.gmra.mxu0 %v417
    %v523 = vpop.f32.mrf.mxu0
    %v524 = vadd.f32 0.0, %v523
    %v525 = vpop.f32.mrf.mxu0
    %526 = vmatprep.mubr.f32.mxu0 0.0
    %527 = vmatmul.mubr.f32.gmra.mxu0 %v418
    %v528 = vpop.f32.mrf.mxu0
    %v529 = vadd.f32 0.0, %v528
    %v530 = vpop.f32.mrf.mxu0
    %531 = vmatprep.mubr.f32.mxu0 0.0
    %532 = vmatmul.mubr.f32.gmra.mxu0 %v419
    %v533 = vpop.f32.mrf.mxu0
    %v534 = vadd.f32 0.0, %v533
    %v535 = vpop.f32.mrf.mxu0
    %536 = vmatprep.mubr.f32.mxu0 0.0
    %537 = vmatmul.mubr.f32.gmra.mxu0 %v420
    %v538 = vpop.f32.mrf.mxu0
    %v539 = vadd.f32 0.0, %v538
    %v540 = vpop.f32.mrf.mxu0
    %541 = vmatprep.mubr.f32.mxu0 0.0
    %542 = vmatmul.mubr.f32.gmra.mxu0 %v421
    %v543 = vpop.f32.mrf.mxu0
    %v544 = vadd.f32 0.0, %v543
    %v545 = vpop.f32.mrf.mxu0
    %546 = vmatprep.mubr.f32.mxu0 0.0
    %547 = vmatmul.mubr.f32.gmra.mxu0 %v422
    %v548 = vpop.f32.mrf.mxu0
    %v549 = vadd.f32 0.0, %v548
    %v550 = vpop.f32.mrf.mxu0
    %551 = vmatprep.mubr.f32.mxu0 0.0
    %552 = vmatmul.mubr.f32.gmra.mxu0 %v423
    %v553 = vpop.f32.mrf.mxu0
    %v554 = vadd.f32 0.0, %v553
    %v555 = vpop.f32.mrf.mxu0
    %556 = vmatprep.mubr.f32.mxu0 0.0
    %557 = vmatmul.mubr.f32.gmra.mxu0 %v424
    %v558 = vpop.f32.mrf.mxu0
    %v559 = vadd.f32 0.0, %v558
    %v560 = vpop.f32.mrf.mxu0
    %561 = vmatprep.mubr.f32.mxu0 0.0
    %562 = vmatmul.mubr.f32.gmra.mxu0 %v425
    %v563 = vpop.f32.mrf.mxu0
    %v564 = vadd.f32 0.0, %v563
    %v565 = vpop.f32.mrf.mxu0
    %566 = vmatprep.mubr.f32.mxu0 0.0
    %567 = vmatmul.mubr.f32.gmra.mxu0 %v426
    %v568 = vpop.f32.mrf.mxu0
    %v569 = vadd.f32 0.0, %v568
    %v570 = vpop.f32.mrf.mxu0
    %571 = vmatprep.mubr.f32.mxu0 0.0
    %572 = vmatmul.mubr.f32.gmra.mxu0 %v427
    %v573 = vpop.f32.mrf.mxu0
    %v574 = vadd.f32 0.0, %v573
    %v575 = vpop.f32.mrf.mxu0
    %576 = vmatprep.mubr.f32.mxu0 0.0
    %577 = vmatmul.mubr.f32.gmra.mxu0 %v428
    %v578 = vpop.f32.mrf.mxu0
    %v579 = vadd.f32 0.0, %v578
    %v580 = vpop.f32.mrf.mxu0
    %581 = vmatprep.mubr.f32.mxu0 0.0
    %582 = vmatmul.mubr.f32.gmra.mxu0 %v429
    %v583 = vpop.f32.mrf.mxu0
    %v584 = vadd.f32 0.0, %v583
    %v585 = vpop.f32.mrf.mxu0
    %586 = vmatprep.mubr.f32.mxu0 0.0
    %587 = vmatmul.mubr.f32.gmra.mxu0 %v430
    %v588 = vpop.f32.mrf.mxu0
    %v589 = vadd.f32 0.0, %v588
    %v590 = vpop.f32.mrf.mxu0
    %591 = vmatprep.mubr.f32.mxu0 0.0
    %592 = vmatmul.mubr.f32.gmra.mxu0 %v431
    %v593 = vpop.f32.mrf.mxu0
    %v594 = vadd.f32 0.0, %v593
    %v595 = vpop.f32.mrf.mxu0
    %596 = vmatprep.mubr.f32.mxu0 0.0
    %597 = vmatmul.mubr.f32.gmra.mxu0 %v432
    %v598 = vpop.f32.mrf.mxu0
    %v599 = vadd.f32 0.0, %v598
    %v600 = vpop.f32.mrf.mxu0
    %601 = vmatprep.mubr.f32.mxu0 0.0
    %602 = vmatmul.mubr.f32.gmra.mxu0 %v433
    %v603 = vpop.f32.mrf.mxu0
    %v604 = vadd.f32 0.0, %v603
    %v605 = vpop.f32.mrf.mxu0
    %606 = vmatprep.mubr.f32.mxu0 0.0
    %607 = vmatmul.mubr.f32.gmra.mxu0 %v434
    %v608 = vpop.f32.mrf.mxu0
    %v609 = vadd.f32 0.0, %v608
    %v610 = vpop.f32.mrf.mxu0
    %611 = vmatprep.mubr.f32.mxu0 0.0
    %612 = vmatmul.mubr.f32.gmra.mxu0 %v435
    %v613 = vpop.f32.mrf.mxu0
    %v614 = vadd.f32 0.0, %v613
    %v615 = vpop.f32.mrf.mxu0
    %616 = vmatprep.mubr.f32.mxu0 0.0
    %617 = vmatmul.mubr.f32.gmra.mxu0 %v436
    %v618 = vpop.f32.mrf.mxu0
    %v619 = vadd.f32 0.0, %v618
    %v620 = vpop.f32.mrf.mxu0
    %621 = vmatprep.mubr.f32.mxu0 0.0
    %622 = vmatmul.mubr.f32.gmra.mxu0 %v437
    %v623 = vpop.f32.mrf.mxu0
    %v624 = vadd.f32 0.0, %v623
    %v625 = vpop.f32.mrf.mxu0
    %626 = vmatprep.mubr.f32.mxu0 0.0
    %627 = vmatmul.mubr.f32.gmra.mxu0 %v438
    %v628 = vpop.f32.mrf.mxu0
    %v629 = vadd.f32 0.0, %v628
    %v630 = vpop.f32.mrf.mxu0
    %631 = vmatprep.mubr.f32.mxu0 0.0
    %632 = vmatmul.mubr.f32.gmra.mxu0 %v439
    %v633 = vpop.f32.mrf.mxu0
    %v634 = vadd.f32 0.0, %v633
    %v635 = vpop.f32.mrf.mxu0
    %636 = vmatprep.mubr.f32.mxu0 0.0
    %637 = vmatmul.mubr.f32.gmra.mxu0 %v440
    %v638 = vpop.f32.mrf.mxu0
    %v639 = vadd.f32 0.0, %v638
    %v640 = vpop.f32.mrf.mxu0
    %641 = vmatprep.mubr.f32.mxu0 0.0
    %642 = vmatmul.mubr.f32.gmra.mxu0 %v441
    %v643 = vpop.f32.mrf.mxu0
    %v644 = vadd.f32 0.0, %v643
    %v645 = vpop.f32.mrf.mxu0
    %646 = vmatprep.mubr.f32.mxu0 0.0
    %647 = vmatmul.mubr.f32.gmra.mxu0 %v442
    %v648 = vpop.f32.mrf.mxu0
    %v649 = vadd.f32 0.0, %v648
    %v650 = vpop.f32.mrf.mxu0
    %651 = vmatprep.mubr.f32.mxu0 0.0
    %652 = vmatmul.mubr.f32.gmra.mxu0 %v443
    %v653 = vpop.f32.mrf.mxu0
    %v654 = vadd.f32 0.0, %v653
    %v655 = vpop.f32.mrf.mxu0
    %656 = vmatprep.mubr.f32.mxu0 0.0
    %657 = vmatmul.mubr.f32.gmra.mxu0 %v444
    %v658 = vpop.f32.mrf.mxu0
    %v659 = vadd.f32 0.0, %v658
    %v660 = vpop.f32.mrf.mxu0
    %661 = vmatprep.mubr.f32.mxu0 0.0
    %662 = vmatmul.mubr.f32.gmra.mxu0 %v445
    %v663 = vpop.f32.mrf.mxu0
    %v664 = vadd.f32 0.0, %v663
    %v665 = vpop.f32.mrf.mxu0
    %666 = vmatprep.mubr.f32.mxu0 0.0
    %667 = vmatmul.mubr.f32.gmra.mxu0 %v446
    %v668 = vpop.f32.mrf.mxu0
    %v669 = vadd.f32 0.0, %v668
    %v670 = vpop.f32.mrf.mxu0
    %671 = vdwg.mxu0
    %v672 = vmax.f32 %v514, 0.0
    %v673 = vmax.f32 %v519, 0.0
    %v674 = vmax.f32 %v524, 0.0
    %v675 = vmax.f32 %v529, 0.0
    %v676 = vmax.f32 %v534, 0.0
    %v677 = vmax.f32 %v539, 0.0
    %v678 = vmax.f32 %v544, 0.0
    %v679 = vmax.f32 %v549, 0.0
    %v680 = vmax.f32 %v554, 0.0
    %v681 = vmax.f32 %v559, 0.0
    %v682 = vmax.f32 %v564, 0.0
    %v683 = vmax.f32 %v569, 0.0
    %v684 = vmax.f32 %v574, 0.0
    %v685 = vmax.f32 %v579, 0.0
    %v686 = vmax.f32 %v584, 0.0
    %v687 = vmax.f32 %v589, 0.0
    %v688 = vmax.f32 %v594, 0.0
    %v689 = vmax.f32 %v599, 0.0
    %v690 = vmax.f32 %v604, 0.0
    %v691 = vmax.f32 %v609, 0.0
    %v692 = vmax.f32 %v614, 0.0
    %v693 = vmax.f32 %v619, 0.0
    %v694 = vmax.f32 %v624, 0.0
    %v695 = vmax.f32 %v629, 0.0
    %v696 = vmax.f32 %v634, 0.0
    %v697 = vmax.f32 %v639, 0.0
    %v698 = vmax.f32 %v644, 0.0
    %v699 = vmax.f32 %v649, 0.0
    %v700 = vmax.f32 %v654, 0.0
    %v701 = vmax.f32 %v659, 0.0
    %v702 = vmax.f32 %v664, 0.0
    %v703 = vmax.f32 %v669, 0.0
    %704 = vmatprep.subr.mxu0 0.0
    %705 = vmatpush1.msra.mxu0 %v92
    %706 = vmatprep.subr.mxu0 0.0
    %707 = vmatpush1.msra.mxu0 %v91
    %708 = vmatprep.subr.mxu0 0.0
    %709 = vmatpush1.msra.mxu0 %v90
    %710 = vmatprep.subr.mxu0 0.0
    %711 = vmatpush1.msra.mxu0 %v89
    %712 = vmatprep.subr.mxu0 0.0
    %713 = vmatpush1.msra.mxu0 %v88
    %714 = vmatprep.subr.mxu0 0.0
    %715 = vmatpush1.msra.mxu0 %v87
    %716 = vmatprep.subr.mxu0 0.0
    %717 = vmatpush1.msra.mxu0 %v86
    %718 = vmatprep.subr.mxu0 0.0
    %719 = vmatpush1.msra.mxu0 %v85
    %720 = vmatprep.subr.mxu0 0.0
    %721 = vmatpush1.msra.mxu0 %v84
    %722 = vmatprep.subr.mxu0 0.0
    %723 = vmatpush1.msra.mxu0 %v83
    %724 = vmatprep.subr.mxu0 0.0
    %725 = vmatpush1.msra.mxu0 %v82
    %726 = vmatprep.subr.mxu0 0.0
    %727 = vmatpush1.msra.mxu0 %v81
    %728 = vmatprep.subr.mxu0 0.0
    %729 = vmatpush1.msra.mxu0 %v80
    %730 = vmatprep.subr.mxu0 0.0
    %731 = vmatpush1.msra.mxu0 %v79
    %732 = vmatprep.subr.mxu0 0.0
    %733 = vmatpush1.msra.mxu0 %v78
    %734 = vmatprep.subr.mxu0 0.0
    %735 = vmatpush1.msra.mxu0 %v77
    %736 = vmatprep.subr.mxu0 0.0
    %737 = vmatpush2.msra.mxu0 0.0
    %738 = vmatprep.subr.mxu0 0.0
    %739 = vmatpush2.msra.mxu0 0.0
    %740 = vmatprep.subr.mxu0 0.0
    %741 = vmatpush2.msra.mxu0 0.0
    %742 = vmatprep.subr.mxu0 0.0
    %743 = vmatpush2.msra.mxu0 0.0
    %744 = vmatprep.subr.mxu0 0.0
    %745 = vmatpush2.msra.mxu0 0.0
    %746 = vmatprep.subr.mxu0 0.0
    %747 = vmatpush2.msra.mxu0 0.0
    %748 = vmatprep.subr.mxu0 0.0
    %749 = vmatpush2.msra.mxu0 0.0
    %750 = vmatprep.subr.mxu0 0.0
    %751 = vmatpush2.msra.mxu0 0.0
    %752 = vmatprep.subr.mxu0 0.0
    %753 = vmatpush2.msra.mxu0 0.0
    %754 = vmatprep.subr.mxu0 0.0
    %755 = vmatpush2.msra.mxu0 0.0
    %756 = vmatprep.subr.mxu0 0.0
    %757 = vmatpush2.msra.mxu0 0.0
    %758 = vmatprep.subr.mxu0 0.0
    %759 = vmatpush2.msra.mxu0 0.0
    %760 = vmatprep.subr.mxu0 0.0
    %761 = vmatpush2.msra.mxu0 0.0
    %762 = vmatprep.subr.mxu0 0.0
    %763 = vmatpush2.msra.mxu0 0.0
    %764 = vmatprep.subr.mxu0 0.0
    %765 = vmatpush2.msra.mxu0 0.0
    %766 = vmatprep.subr.mxu0 0.0
    %767 = vmatpush2.msra.mxu0 0.0
    %768 = vmatprep.mubr.f32.mxu0 0.0
    %769 = vmatmul.mubr.f32.gmra.mxu0 %v672
    %v770 = vpop.f32.mrf.mxu0
    %v771 = vadd.f32 0.0, %v770
    %v772 = vpop.f32.mrf.mxu0
    %773 = vmatprep.mubr.f32.mxu0 0.0
    %774 = vmatmul.mubr.f32.gmra.mxu0 %v673
    %v775 = vpop.f32.mrf.mxu0
    %v776 = vadd.f32 0.0, %v775
    %v777 = vpop.f32.mrf.mxu0
    %778 = vmatprep.mubr.f32.mxu0 0.0
    %779 = vmatmul.mubr.f32.gmra.mxu0 %v674
    %v780 = vpop.f32.mrf.mxu0
    %v781 = vadd.f32 0.0, %v780
    %v782 = vpop.f32.mrf.mxu0
    %783 = vmatprep.mubr.f32.mxu0 0.0
    %784 = vmatmul.mubr.f32.gmra.mxu0 %v675
    %v785 = vpop.f32.mrf.mxu0
    %v786 = vadd.f32 0.0, %v785
    %v787 = vpop.f32.mrf.mxu0
    %788 = vmatprep.mubr.f32.mxu0 0.0
    %789 = vmatmul.mubr.f32.gmra.mxu0 %v676
    %v790 = vpop.f32.mrf.mxu0
    %v791 = vadd.f32 0.0, %v790
    %v792 = vpop.f32.mrf.mxu0
    %793 = vmatprep.mubr.f32.mxu0 0.0
    %794 = vmatmul.mubr.f32.gmra.mxu0 %v677
    %v795 = vpop.f32.mrf.mxu0
    %v796 = vadd.f32 0.0, %v795
    %v797 = vpop.f32.mrf.mxu0
    %798 = vmatprep.mubr.f32.mxu0 0.0
    %799 = vmatmul.mubr.f32.gmra.mxu0 %v678
    %v800 = vpop.f32.mrf.mxu0
    %v801 = vadd.f32 0.0, %v800
    %v802 = vpop.f32.mrf.mxu0
    %803 = vmatprep.mubr.f32.mxu0 0.0
    %804 = vmatmul.mubr.f32.gmra.mxu0 %v679
    %v805 = vpop.f32.mrf.mxu0
    %v806 = vadd.f32 0.0, %v805
    %v807 = vpop.f32.mrf.mxu0
    %808 = vmatprep.mubr.f32.mxu0 0.0
    %809 = vmatmul.mubr.f32.gmra.mxu0 %v680
    %v810 = vpop.f32.mrf.mxu0
    %v811 = vadd.f32 0.0, %v810
    %v812 = vpop.f32.mrf.mxu0
    %813 = vmatprep.mubr.f32.mxu0 0.0
    %814 = vmatmul.mubr.f32.gmra.mxu0 %v681
    %v815 = vpop.f32.mrf.mxu0
    %v816 = vadd.f32 0.0, %v815
    %v817 = vpop.f32.mrf.mxu0
    %818 = vmatprep.mubr.f32.mxu0 0.0
    %819 = vmatmul.mubr.f32.gmra.mxu0 %v682
    %v820 = vpop.f32.mrf.mxu0
    %v821 = vadd.f32 0.0, %v820
    %v822 = vpop.f32.mrf.mxu0
    %823 = vmatprep.mubr.f32.mxu0 0.0
    %824 = vmatmul.mubr.f32.gmra.mxu0 %v683
    %v825 = vpop.f32.mrf.mxu0
    %v826 = vadd.f32 0.0, %v825
    %v827 = vpop.f32.mrf.mxu0
    %828 = vmatprep.mubr.f32.mxu0 0.0
    %829 = vmatmul.mubr.f32.gmra.mxu0 %v684
    %v830 = vpop.f32.mrf.mxu0
    %v831 = vadd.f32 0.0, %v830
    %v832 = vpop.f32.mrf.mxu0
    %833 = vmatprep.mubr.f32.mxu0 0.0
    %834 = vmatmul.mubr.f32.gmra.mxu0 %v685
    %v835 = vpop.f32.mrf.mxu0
    %v836 = vadd.f32 0.0, %v835
    %v837 = vpop.f32.mrf.mxu0
    %838 = vmatprep.mubr.f32.mxu0 0.0
    %839 = vmatmul.mubr.f32.gmra.mxu0 %v686
    %v840 = vpop.f32.mrf.mxu0
    %v841 = vadd.f32 0.0, %v840
    %v842 = vpop.f32.mrf.mxu0
    %843 = vmatprep.mubr.f32.mxu0 0.0
    %844 = vmatmul.mubr.f32.gmra.mxu0 %v687
    %v845 = vpop.f32.mrf.mxu0
    %v846 = vadd.f32 0.0, %v845
    %v847 = vpop.f32.mrf.mxu0
    %848 = vmatprep.mubr.f32.mxu0 0.0
    %849 = vmatmul.mubr.f32.gmra.mxu0 %v688
    %v850 = vpop.f32.mrf.mxu0
    %v851 = vadd.f32 0.0, %v850
    %v852 = vpop.f32.mrf.mxu0
    %853 = vmatprep.mubr.f32.mxu0 0.0
    %854 = vmatmul.mubr.f32.gmra.mxu0 %v689
    %v855 = vpop.f32.mrf.mxu0
    %v856 = vadd.f32 0.0, %v855
    %v857 = vpop.f32.mrf.mxu0
    %858 = vmatprep.mubr.f32.mxu0 0.0
    %859 = vmatmul.mubr.f32.gmra.mxu0 %v690
    %v860 = vpop.f32.mrf.mxu0
    %v861 = vadd.f32 0.0, %v860
    %v862 = vpop.f32.mrf.mxu0
    %863 = vmatprep.mubr.f32.mxu0 0.0
    %864 = vmatmul.mubr.f32.gmra.mxu0 %v691
    %v865 = vpop.f32.mrf.mxu0
    %v866 = vadd.f32 0.0, %v865
    %v867 = vpop.f32.mrf.mxu0
    %868 = vmatprep.mubr.f32.mxu0 0.0
    %869 = vmatmul.mubr.f32.gmra.mxu0 %v692
    %v870 = vpop.f32.mrf.mxu0
    %v871 = vadd.f32 0.0, %v870
    %v872 = vpop.f32.mrf.mxu0
    %873 = vmatprep.mubr.f32.mxu0 0.0
    %874 = vmatmul.mubr.f32.gmra.mxu0 %v693
    %v875 = vpop.f32.mrf.mxu0
    %v876 = vadd.f32 0.0, %v875
    %v877 = vpop.f32.mrf.mxu0
    %878 = vmatprep.mubr.f32.mxu0 0.0
    %879 = vmatmul.mubr.f32.gmra.mxu0 %v694
    %v880 = vpop.f32.mrf.mxu0
    %v881 = vadd.f32 0.0, %v880
    %v882 = vpop.f32.mrf.mxu0
    %883 = vmatprep.mubr.f32.mxu0 0.0
    %884 = vmatmul.mubr.f32.gmra.mxu0 %v695
    %v885 = vpop.f32.mrf.mxu0
    %v886 = vadd.f32 0.0, %v885
    %v887 = vpop.f32.mrf.mxu0
    %888 = vmatprep.mubr.f32.mxu0 0.0
    %889 = vmatmul.mubr.f32.gmra.mxu0 %v696
    %v890 = vpop.f32.mrf.mxu0
    %v891 = vadd.f32 0.0, %v890
    %v892 = vpop.f32.mrf.mxu0
    %893 = vmatprep.mubr.f32.mxu0 0.0
    %894 = vmatmul.mubr.f32.gmra.mxu0 %v697
    %v895 = vpop.f32.mrf.mxu0
    %v896 = vadd.f32 0.0, %v895
    %v897 = vpop.f32.mrf.mxu0
    %898 = vmatprep.mubr.f32.mxu0 0.0
    %899 = vmatmul.mubr.f32.gmra.mxu0 %v698
    %v900 = vpop.f32.mrf.mxu0
    %v901 = vadd.f32 0.0, %v900
    %v902 = vpop.f32.mrf.mxu0
    %903 = vmatprep.mubr.f32.mxu0 0.0
    %904 = vmatmul.mubr.f32.gmra.mxu0 %v699
    %v905 = vpop.f32.mrf.mxu0
    %v906 = vadd.f32 0.0, %v905
    %v907 = vpop.f32.mrf.mxu0
    %908 = vmatprep.mubr.f32.mxu0 0.0
    %909 = vmatmul.mubr.f32.gmra.mxu0 %v700
    %v910 = vpop.f32.mrf.mxu0
    %v911 = vadd.f32 0.0, %v910
    %v912 = vpop.f32.mrf.mxu0
    %913 = vmatprep.mubr.f32.mxu0 0.0
    %914 = vmatmul.mubr.f32.gmra.mxu0 %v701
    %v915 = vpop.f32.mrf.mxu0
    %v916 = vadd.f32 0.0, %v915
    %v917 = vpop.f32.mrf.mxu0
    %918 = vmatprep.mubr.f32.mxu0 0.0
    %919 = vmatmul.mubr.f32.gmra.mxu0 %v702
    %v920 = vpop.f32.mrf.mxu0
    %v921 = vadd.f32 0.0, %v920
    %v922 = vpop.f32.mrf.mxu0
    %923 = vmatprep.mubr.f32.mxu0 0.0
    %924 = vmatmul.mubr.f32.gmra.mxu0 %v703
    %v925 = vpop.f32.mrf.mxu0
    %v926 = vadd.f32 0.0, %v925
    %v927 = vpop.f32.mrf.mxu0
    %928 = vdwg.mxu0
    %929 = vst [vmem:[#allocation5] sm:$0xff] %v771
    %930 = vst [vmem:[#allocation5 + $0x8] sm:$0xff] %v776
    %931 = vst [vmem:[#allocation5 + $0x10] sm:$0xff] %v781
    %932 = vst [vmem:[#allocation5 + $0x18] sm:$0xff] %v786
    %933 = vst [vmem:[#allocation5 + $0x20] sm:$0xff] %v791
    %934 = vst [vmem:[#allocation5 + $0x28] sm:$0xff] %v796
    %935 = vst [vmem:[#allocation5 + $0x30] sm:$0xff] %v801
    %936 = vst [vmem:[#allocation5 + $0x38] sm:$0xff] %v806
    %937 = vst [vmem:[#allocation5 + $0x40] sm:$0xff] %v811
    %938 = vst [vmem:[#allocation5 + $0x48] sm:$0xff] %v816
    %939 = vst [vmem:[#allocation5 + $0x50] sm:$0xff] %v821
    %940 = vst [vmem:[#allocation5 + $0x58] sm:$0xff] %v826
    %941 = vst [vmem:[#allocation5 + $0x60] sm:$0xff] %v831
    %942 = vst [vmem:[#allocation5 + $0x68] sm:$0xff] %v836
    %943 = vst [vmem:[#allocation5 + $0x70] sm:$0xff] %v841
    %944 = vst [vmem:[#allocation5 + $0x78] sm:$0xff] %v846
    %945 = vst [vmem:[#allocation5 + $0x80] sm:$0xff] %v851
    %946 = vst [vmem:[#allocation5 + $0x88] sm:$0xff] %v856
    %947 = vst [vmem:[#allocation5 + $0x90] sm:$0xff] %v861
    %948 = vst [vmem:[#allocation5 + $0x98] sm:$0xff] %v866
    %949 = vst [vmem:[#allocation5 + $0xa0] sm:$0xff] %v871
    %950 = vst [vmem:[#allocation5 + $0xa8] sm:$0xff] %v876
    %951 = vst [vmem:[#allocation5 + $0xb0] sm:$0xff] %v881
    %952 = vst [vmem:[#allocation5 + $0xb8] sm:$0xff] %v886
    %953 = vst [vmem:[#allocation5 + $0xc0] sm:$0xff] %v891
    %954 = vst [vmem:[#allocation5 + $0xc8] sm:$0xff] %v896
    %955 = vst [vmem:[#allocation5 + $0xd0] sm:$0xff] %v901
    %956 = vst [vmem:[#allocation5 + $0xd8] sm:$0xff] %v906
    %957 = vst [vmem:[#allocation5 + $0xe0] sm:$0xff] %v911
    %958 = vst [vmem:[#allocation5 + $0xe8] sm:$0xff] %v916
    %959 = vst [vmem:[#allocation5 + $0xf0] sm:$0xff] %v921
    %960 = vst [vmem:[#allocation5 + $0xf8] sm:$0xff] %v926
    // Predicated region
    $region14: #{tpu_custom_call.1} parent=1 // pred_check
      _
    $region15: #{tpu_custom_call.1} parent=1 // pred_check_branch
      %962 = sbr.rel (0) target = $region17
    $region16: #{tpu_custom_call.1} parent=1 // pred_region
      %s964 = ssub.s32 4096, 4096
      %965 = vsyncadd [#allocation4], %s964
      %s966 = sshll.u32 [#allocation5], 4
      %s967 = int_to_ptr.vmem [resolvable:$true] %s966
      %972 = dma.vmem_to_hbm [thread:$0]  %s967, 4096, %s2, [#allocation4], 128, 128, 8
    $region17: #{tpu_custom_call.1} parent=1 // pred_fallthru
      _
    // Predicated region
    $region18: #{tpu_custom_call.1} parent=1 // pred_check
      _
    $region19: #{tpu_custom_call.1} parent=1 // pred_check_branch
      %974 = sbr.rel (0) target = $region21
    $region20: #{tpu_custom_call.1} parent=1 // pred_region
      %975 = dma.done [#allocation4], 4096
    $region21: #{tpu_custom_call.1} parent=1 // pred_fallthru
      _
    %976 = vsyncpa [#allocation3], 1
    %977 = vsyncpa [#allocation4], 1

</llo_original>
